<compile_context>
chip_gen: v6e
topology: v6e:2x2x1
jax: 0.10.0
libtpu: 0.0.40
codegen_flags: <defaults>
</compile_context>

<pallas_src>
import functools

import jax
import jax.numpy as jnp
from jax.experimental import pallas as pl
from jax.experimental.pallas import tpu as pltpu

EPS = 1e-3


def _round_up(x, m):
    return ((x + m - 1) // m) * m


def _conv_stats_kernel(x_ref, w_ref, y_ref, sum_ref, sumsq_ref, *, hw, tile):
    """Pass 1: y = W @ x_tile; accumulate per-channel sum and sum-of-squares."""
    n = pl.program_id(0)
    ti = pl.program_id(1)

    @pl.when((n == 0) & (ti == 0))
    def _():
        sum_ref[...] = jnp.zeros_like(sum_ref)
        sumsq_ref[...] = jnp.zeros_like(sumsq_ref)

    x = x_ref[0]                # (Cin, tile)
    w = w_ref[...]              # (Cout, Cin)
    y = jnp.dot(w, x, preferred_element_type=jnp.float32)   # (Cout, tile)

    if hw % tile != 0:
        # The last spatial tile is padded by Pallas with unspecified data;
        # zero those columns so they do not pollute the batch statistics
        # (their output-column stores are dropped by Pallas anyway).
        col = ti * tile + jax.lax.broadcasted_iota(jnp.int32, y.shape, 1)
        y = jnp.where(col < hw, y, 0.0)

    y_ref[0] = y
    sum_ref[...] += jnp.sum(y, axis=1, keepdims=True)
    sumsq_ref[...] += jnp.sum(y * y, axis=1, keepdims=True)


def _bn_relu_kernel(y_ref, scale_ref, bias_ref, o_ref):
    """Pass 2: out = relu(y * scale + bias) with per-channel scale/bias."""
    out = y_ref[0] * scale_ref[...] + bias_ref[...]
    o_ref[0] = jnp.maximum(out, 0.0).astype(o_ref.dtype)


def conv2d_bn_relu(x_nchw, weight, gamma, beta, *, hw_tile=512, eps=EPS):
    """x_nchw: (N, Cin, H, W); weight: (Cout, Cin[,1,1]); gamma/beta: (Cout,)."""
    N, Cin, H, W = x_nchw.shape
    Cout = weight.shape[0]
    HW = H * W

    x3 = x_nchw.reshape(N, Cin, HW).astype(jnp.float32)   # pure view, stays NCHW
    w = weight.reshape(Cout, Cin).astype(jnp.float32)

    tile = min(hw_tile, _round_up(HW, 128))
    num_t = pl.cdiv(HW, tile)
    grid = (N, num_t)

    # ---------------- pass 1: conv + batch statistics ----------------
    flops1 = 2 * N * HW * Cin * Cout + 3 * N * HW * Cout
    bytes1 = 4 * (N * Cin * HW + Cin * Cout + N * Cout * HW + 2 * Cout)
    y, ch_sum, ch_sumsq = pl.pallas_call(
        functools.partial(_conv_stats_kernel, hw=HW, tile=tile),
        out_shape=(
            jax.ShapeDtypeStruct((N, Cout, HW), jnp.float32),
            jax.ShapeDtypeStruct((Cout, 1), jnp.float32),
            jax.ShapeDtypeStruct((Cout, 1), jnp.float32),
        ),
        grid_spec=pltpu.PrefetchScalarGridSpec(
            num_scalar_prefetch=0,
            grid=grid,
            in_specs=[
                pl.BlockSpec((1, Cin, tile), lambda n, t: (n, 0, t)),
                pl.BlockSpec((Cout, Cin), lambda n, t: (0, 0)),
            ],
            out_specs=(
                pl.BlockSpec((1, Cout, tile), lambda n, t: (n, 0, t)),
                pl.BlockSpec((Cout, 1), lambda n, t: (0, 0)),
                pl.BlockSpec((Cout, 1), lambda n, t: (0, 0)),
            ),
        ),
        compiler_params=pltpu.CompilerParams(
            dimension_semantics=("arbitrary", "arbitrary"),
        ),
        cost_estimate=pl.CostEstimate(
            flops=flops1, transcendentals=0, bytes_accessed=bytes1),
    )(x3, w)

    # --- fold batch stats + affine into per-channel scale / bias (16 values) ---
    count = float(N * HW)                                   # true (unpadded) count
    mean = ch_sum / count                                   # (Cout, 1)
    var = jnp.maximum(ch_sumsq / count - mean * mean, 0.0)  # biased var (train mode)
    inv_std = jax.lax.rsqrt(var + eps)
    scale = gamma.reshape(Cout, 1).astype(jnp.float32) * inv_std
    bias = beta.reshape(Cout, 1).astype(jnp.float32) - mean * scale

    # ---------------- pass 2: normalize + ReLU (fully parallel) ----------------
    flops2 = 3 * N * HW * Cout
    bytes2 = 4 * (2 * N * Cout * HW + 2 * Cout)
    out = pl.pallas_call(
        _bn_relu_kernel,
        out_shape=jax.ShapeDtypeStruct((N, Cout, HW), jnp.float32),
        grid_spec=pltpu.PrefetchScalarGridSpec(
            num_scalar_prefetch=0,
            grid=grid,
            in_specs=[
                pl.BlockSpec((1, Cout, tile), lambda n, t: (n, 0, t)),
                pl.BlockSpec((Cout, 1), lambda n, t: (0, 0)),
                pl.BlockSpec((Cout, 1), lambda n, t: (0, 0)),
            ],
            out_specs=pl.BlockSpec((1, Cout, tile), lambda n, t: (n, 0, t)),
        ),
        compiler_params=pltpu.CompilerParams(
            dimension_semantics=("parallel", "parallel"),
        ),
        cost_estimate=pl.CostEstimate(
            flops=flops2, transcendentals=0, bytes_accessed=bytes2),
    )(y, scale, bias)

    return out.reshape(N, Cout, H, W)


if __name__ == "__main__":
    key = jax.random.PRNGKey(0)
    k_x, k_w, k_g, k_b = jax.random.split(key, 4)

    # Shapes from the module spec: x24 = (1, 192, 28, 28), Conv2d(192 -> 16, 1x1).
    N, Cin, H, W = 1, 192, 28, 28
    Cout = 16

    x = jax.random.normal(k_x, (N, Cin, H, W), dtype=jnp.float32)
    weight = jax.random.normal(k_w, (Cout, Cin, 1, 1), dtype=jnp.float32) * 0.05
    gamma = 1.0 + 0.1 * jax.random.normal(k_g, (Cout,), dtype=jnp.float32)
    beta = 0.1 * jax.random.normal(k_b, (Cout,), dtype=jnp.float32)

    out = conv2d_bn_relu(x, weight, gamma, beta)
    jax.block_until_ready(out)

    # Pure-JAX reference of the same math (1x1 conv + train-mode BN + ReLU).
    w2 = weight.reshape(Cout, Cin)
    xm = x.reshape(N, Cin, H * W)
    y_ref = jnp.einsum("oc,nch->noh", w2, xm)
    mean = y_ref.mean(axis=(0, 2), keepdims=True)
    var = ((y_ref - mean) ** 2).mean(axis=(0, 2), keepdims=True)
    ref = (y_ref - mean) / jnp.sqrt(var + EPS)
    ref = ref * gamma.reshape(1, Cout, 1) + beta.reshape(1, Cout, 1)
    ref = jnp.maximum(ref, 0.0).reshape(N, Cout, H, W)

    err = float(jnp.max(jnp.abs(out - ref)))
    assert jnp.allclose(out, ref, atol=1e-3, rtol=1e-3), f"max abs err = {err}"

    print("KERNEL_OK")
</pallas_src>

<mosaic_0001>
module attributes {stable_mosaic.version = 11 : i64} {
  func.func @_conv_stats_kernel(%arg0: i32, %arg1: i32, %arg2: memref<1x192x512xf32, #tpu.memory_space<vmem>>, %arg3: memref<16x192xf32, #tpu.memory_space<vmem>>, %arg4: memref<1x16x512xf32, #tpu.memory_space<vmem>>, %arg5: memref<16x1xf32, #tpu.memory_space<vmem>>, %arg6: memref<16x1xf32, #tpu.memory_space<vmem>>) attributes {dimension_semantics = [#tpu.dimension_semantics<arbitrary>, #tpu.dimension_semantics<arbitrary>], iteration_bounds = array<i64: 1, 2>, scalar_prefetch = 0 : i64, scratch_operands = 0 : i64, tpu.core_type = #tpu.core_type<tc>, window_params = [{transform_indices = @transform_0, window_bounds = array<i64: 1, 192, 512>}, {pipeline_mode = #tpu.pipeline_mode<synchronous>, transform_indices = @transform_1, window_bounds = array<i64: 16, 192>}, {transform_indices = @transform_2, window_bounds = array<i64: 1, 16, 512>}, {pipeline_mode = #tpu.pipeline_mode<synchronous>, transform_indices = @transform_3, window_bounds = array<i64: 16, 1>}, {pipeline_mode = #tpu.pipeline_mode<synchronous>, transform_indices = @transform_4, window_bounds = array<i64: 16, 1>}]} {
    %c0_i32 = arith.constant 0 : i32
    %0 = arith.cmpi eq, %arg0, %c0_i32 : i32
    %c0_i32_0 = arith.constant 0 : i32
    %1 = arith.cmpi eq, %arg1, %c0_i32_0 : i32
    %2 = arith.andi %0, %1 : i1
    %3 = arith.extui %2 : i1 to i32
    %c0_i32_1 = arith.constant 0 : i32
    %4 = arith.cmpi ne, %3, %c0_i32_1 : i32
    scf.if %4 {
      %cst_20 = arith.constant 0.000000e+00 : f32
      %31 = vector.broadcast %cst_20 : f32 to vector<16x1xf32>
      %c0_21 = arith.constant 0 : index
      %c0_22 = arith.constant 0 : index
      %32 = vector.load %arg5[%c0_21, %c0_22] : memref<16x1xf32, #tpu.memory_space<vmem>>, vector<16x1xf32>
      tpu.vector_store %arg5[%c0_21, %c0_22], %31 {strides = array<i32>} : memref<16x1xf32, #tpu.memory_space<vmem>>, vector<16x1xf32>,
      %cst_23 = arith.constant 0.000000e+00 : f32
      %33 = vector.broadcast %cst_23 : f32 to vector<16x1xf32>
      %c0_24 = arith.constant 0 : index
      %c0_25 = arith.constant 0 : index
      %34 = vector.load %arg6[%c0_24, %c0_25] : memref<16x1xf32, #tpu.memory_space<vmem>>, vector<16x1xf32>
      tpu.vector_store %arg6[%c0_24, %c0_25], %33 {strides = array<i32>} : memref<16x1xf32, #tpu.memory_space<vmem>>, vector<16x1xf32>,
    } else {
    }
    %c0 = arith.constant 0 : index
    %c0_2 = arith.constant 0 : index
    %c0_3 = arith.constant 0 : index
    %5 = vector.load %arg2[%c0, %c0_2, %c0_3] : memref<1x192x512xf32, #tpu.memory_space<vmem>>, vector<1x192x512xf32>
    %6 = vector.shape_cast %5 : vector<1x192x512xf32> to vector<192x512xf32>
    %c0_4 = arith.constant 0 : index
    %c0_5 = arith.constant 0 : index
    %7 = vector.load %arg3[%c0_4, %c0_5] : memref<16x192xf32, #tpu.memory_space<vmem>>, vector<16x192xf32>
    %cst = arith.constant dense<0.000000e+00> : vector<16x512xf32>
    %8 = tpu.matmul %7, %6, %cst {dimension_numbers = #tpu.dot_dimension_numbers<[1], [0], [0], [1], [0, 0, 1, 1], [], []>} : vector<16x192xf32>, vector<192x512xf32>, vector<16x512xf32> -> vector<16x512xf32>
    %c512_i32 = arith.constant 512 : i32
    %9 = arith.muli %arg1, %c512_i32 : i32
    %10 = tpu.iota {dimensions = array<i32: 1>} : vector<16x512xi32>
    %11 = vector.broadcast %9 : i32 to vector<16x512xi32>
    %12 = arith.addi %11, %10 : vector<16x512xi32>
    %c784_i32 = arith.constant 784 : i32
    %13 = vector.broadcast %c784_i32 : i32 to vector<16x512xi32>
    %14 = arith.cmpi slt, %12, %13 : vector<16x512xi32>
    %cst_6 = arith.constant 0.000000e+00 : f32
    %15 = vector.broadcast %cst_6 : f32 to vector<16x512xf32>
    %16 = arith.select %14, %8, %15 : vector<16x512xi1>, vector<16x512xf32>
    %c0_7 = arith.constant 0 : index
    %c0_8 = arith.constant 0 : index
    %c0_9 = arith.constant 0 : index
    %17 = vector.load %arg4[%c0_7, %c0_8, %c0_9] : memref<1x16x512xf32, #tpu.memory_space<vmem>>, vector<1x16x512xf32>
    %18 = vector.shape_cast %17 : vector<1x16x512xf32> to vector<16x512xf32>
    %19 = vector.shape_cast %16 : vector<16x512xf32> to vector<1x16x512xf32>
    tpu.vector_store %arg4[%c0_7, %c0_8, %c0_9], %19 {strides = array<i32>} : memref<1x16x512xf32, #tpu.memory_space<vmem>>, vector<1x16x512xf32>,
    %c0_10 = arith.constant 0 : index
    %c0_11 = arith.constant 0 : index
    %20 = vector.load %arg5[%c0_10, %c0_11] : memref<16x1xf32, #tpu.memory_space<vmem>>, vector<16x1xf32>
    %cst_12 = arith.constant dense<0.000000e+00> : vector<16xf32>
    %21 = vector.multi_reduction <add>, %16, %cst_12 [1] : vector<16x512xf32> to vector<16xf32>
    %22 = vector.shape_cast %21 : vector<16xf32> to vector<16x1xf32>
    %23 = arith.addf %20, %22 : vector<16x1xf32>
    %c0_13 = arith.constant 0 : index
    %c0_14 = arith.constant 0 : index
    %24 = vector.load %arg5[%c0_13, %c0_14] : memref<16x1xf32, #tpu.memory_space<vmem>>, vector<16x1xf32>
    tpu.vector_store %arg5[%c0_13, %c0_14], %23 {strides = array<i32>} : memref<16x1xf32, #tpu.memory_space<vmem>>, vector<16x1xf32>,
    %c0_15 = arith.constant 0 : index
    %c0_16 = arith.constant 0 : index
    %25 = vector.load %arg6[%c0_15, %c0_16] : memref<16x1xf32, #tpu.memory_space<vmem>>, vector<16x1xf32>
    %26 = arith.mulf %16, %16 : vector<16x512xf32>
    %cst_17 = arith.constant dense<0.000000e+00> : vector<16xf32>
    %27 = vector.multi_reduction <add>, %26, %cst_17 [1] : vector<16x512xf32> to vector<16xf32>
    %28 = vector.shape_cast %27 : vector<16xf32> to vector<16x1xf32>
    %29 = arith.addf %25, %28 : vector<16x1xf32>
    %c0_18 = arith.constant 0 : index
    %c0_19 = arith.constant 0 : index
    %30 = vector.load %arg6[%c0_18, %c0_19] : memref<16x1xf32, #tpu.memory_space<vmem>>, vector<16x1xf32>
    tpu.vector_store %arg6[%c0_18, %c0_19], %29 {strides = array<i32>} : memref<16x1xf32, #tpu.memory_space<vmem>>, vector<16x1xf32>,
    return
  }
  func.func @transform_0(%arg0: i32, %arg1: i32) -> (i32, i32, i32) {
    %c0_i32 = arith.constant 0 : i32
    %c0_i32_0 = arith.constant 0 : i32
    return %arg0, %c0_i32, %arg1 : i32, i32, i32
  }
  func.func @transform_1(%arg0: i32, %arg1: i32) -> (i32, i32) {
    %c0_i32 = arith.constant 0 : i32
    %c0_i32_0 = arith.constant 0 : i32
    %c0_i32_1 = arith.constant 0 : i32
    return %c0_i32, %c0_i32_0 : i32, i32
  }
  func.func @transform_2(%arg0: i32, %arg1: i32) -> (i32, i32, i32) {
    %c0_i32 = arith.constant 0 : i32
    %c0_i32_0 = arith.constant 0 : i32
    return %arg0, %c0_i32, %arg1 : i32, i32, i32
  }
  func.func @transform_3(%arg0: i32, %arg1: i32) -> (i32, i32) {
    %c0_i32 = arith.constant 0 : i32
    %c0_i32_0 = arith.constant 0 : i32
    %c0_i32_1 = arith.constant 0 : i32
    return %c0_i32, %c0_i32_0 : i32, i32
  }
  func.func @transform_4(%arg0: i32, %arg1: i32) -> (i32, i32) {
    %c0_i32 = arith.constant 0 : i32
    %c0_i32_0 = arith.constant 0 : i32
    %c0_i32_1 = arith.constant 0 : i32
    return %c0_i32, %c0_i32_0 : i32, i32
  }
}

</mosaic_0001>

<llo_original>
// kernel: tpu_custom_call.1
$region0: #{tpu_custom_call.1}
  #allocation0 [shape = 'u32[]', space=smem, size = 0x4, offset = 0x4, fixed_abs, tag = 'smem constant byte address 0x4 - core index']
  #allocation1 [shape = 'u32[144,128]{1,0:T(1,128)}', space=vmem, size = 0x12000, scoped, tag = 'internal scratch']
  %s0 = inlined_call_operand.hbm [shape: f32[1,192,784], index: 0, kind: input, shape index: {}]
  %s1 = inlined_call_operand.hbm [shape: f32[16,192], index: 1, kind: input, shape index: {}]
  %s2 = inlined_call_operand.hbm [shape: f32[1,16,784], index: 2, kind: output, shape index: {0}]
  %s3 = inlined_call_operand.vmem [shape: f32[16,1], index: 3, kind: output, shape index: {1}]
  %s4 = inlined_call_operand.vmem [shape: f32[16,1], index: 4, kind: output, shape index: {2}]
  %5 = xla_tuple %s2, %s3, %s4
  %s6 = sld [smem:[#allocation0]]
  $region69: #{tpu_custom_call.1} parent=0
    _
  %s8 = ssub.s32 1, %s6
  %s9 = scalar_select 0, %s8, %s6
  $region1: #{tpu_custom_call.1} parent=0
    #allocation2 [shape = 'u8[786432]{0}', space=vmem, size = 0xc0000, scoped, tag = 'input window, operand 0']
    #allocation3 [shape = 's32[2]{0}', space=sflag, size = 0x8, scoped, tag = 'scoped memory for tpu_custom_call.1']
    #allocation4 [shape = 's32[2]{0}', space=sflag, size = 0x8, scoped, tag = 'scoped memory for tpu_custom_call.1']
    #allocation5 [shape = 'u8[16384]{0}', space=vmem, size = 0x4000, scoped, tag = 'input window, operand 1, single buffered']
    #allocation6 [shape = 's32[1]{0}', space=sflag, size = 0x4, scoped, tag = 'scoped memory for tpu_custom_call.1']
    #allocation7 [shape = 'u8[65536]{0}', space=vmem, size = 0x10000, scoped, tag = 'output window, operand 0']
    %10 = vsyncpa [#allocation3], 0
    %s11 = scalar_lea.sflag [#allocation3], 1
    %12 = vsyncpa %s11, 0
    %13 = vsyncpa [#allocation6], 0
    %14 = vsyncpa [#allocation4], 0
    %s15 = scalar_lea.sflag [#allocation4], 1
    %16 = vsyncpa %s15, 0
    loop: start=0, step=1, limit=4
    $region2: #{tpu_custom_call.1} parent=1 // loop_pre_header
      _
    $region3: #{tpu_custom_call.1} parent=1 // loop_header
      %s18 = sphi 0, %s22
      %p19 = scmp.ge.s32.totalorder %s18, 4
      %s25 = sphi 0, %s37
      %s26 = sphi 0, %s33
      %s27 = sphi 0, %s25
      %s28 = sphi 0, %s26
      %s29 = sphi 0, %s27
      %s30 = sphi 0, %s28
      %s42 = sphi 0, %s44
      %s45 = sphi 0, %s42
      %s46 = sphi 0, %s45
      %s62 = sphi 0, %s46
      %s66 = sphi 0, %s66
      %s68 = sphi 0, %s66
      %s69 = sphi 0, %s68
      %s83 = sphi 0, %s69
      %s91 = sphi 0, %s93
      %s94 = sphi 0, %s91
      %s95 = sphi 0, %s94
      %s111 = sphi 0, %s95
      %s115 = sphi 0, %s115
      %s117 = sphi 0, %s115
      %s118 = sphi 0, %s117
      %s132 = sphi 0, %s118
      %s136 = sphi 0, %s136
      %s138 = sphi 0, %s136
      %s139 = sphi 0, %s138
      %s153 = sphi 0, %s139
    $region4: #{tpu_custom_call.1} parent=1 // loop_header_branch
      %21 = sbr.rel (%p19) target = $region8
    $region5: #{tpu_custom_call.1} parent=1 // loop_body
      %s23 = ssub.s32 %s18, 1
      %s24 = ssub.s32 %s18, 2
      %s31 = sadd.s32 1, %s26
      %p32 = scmp.ge.s32.totalorder %s31, 2
      %s33 = scalar_select %p32, 0, %s31
      %s34 = sadd.s32 1, %s25
      %s35 = scalar_select %p32, %s34, %s25
      %p36 = scmp.ge.s32.totalorder %s35, 1
      %s37 = scalar_select %p36, 0, %s35
      %s38 = ssub.s32 %s25, %s37
      %s39 = ssub.s32 %s26, %s33
      %s40 = sor.u32 %s38, %s39
      %p41 = scmp.eq.s32.totalorder %s40, 0
      %s43 = sadd.s32 %s42, 1
      %s44 = scalar_select %p41, %s42, %s43
      %p47 = pneg %p41
      %p48 = scmp.eq.s32.totalorder %s18, 1
      %p49 = por %p47, %p48
      %p50 = scmp.ne.s32.totalorder %s42, %s45
      %p51 = scmp.eq.s32.totalorder %s18, 0
      %p52 = por %p50, %p51
      %p53 = scmp.ne.s32.totalorder %s42, %s45
      %p54 = scmp.eq.s32.totalorder %s23, 1
      %p55 = por %p53, %p54
      %p56 = scmp.ne.s32.totalorder %s45, %s46
      %p57 = scmp.eq.s32.totalorder %s23, 0
      %p58 = por %p56, %p57
      %p59 = scmp.ne.s32.totalorder %s45, %s46
      %p60 = scmp.eq.s32.totalorder %s24, 1
      %p61 = por %p59, %p60
      %p63 = scmp.ne.s32.totalorder %s46, %s62
      %p64 = scmp.eq.s32.totalorder %s24, 0
      %p65 = por %p63, %p64
      %s67 = sadd.s32 %s66, 1
      %p70 = scmp.eq.s32.totalorder %s18, 1
      %p71 = scmp.ne.s32.totalorder %s66, %s68
      %p72 = scmp.eq.s32.totalorder %s18, 0
      %p73 = por %p71, %p72
      %p74 = scmp.ne.s32.totalorder %s66, %s68
      %p75 = scmp.eq.s32.totalorder %s23, 1
      %p76 = por %p74, %p75
      %p77 = scmp.ne.s32.totalorder %s68, %s69
      %p78 = scmp.eq.s32.totalorder %s23, 0
      %p79 = por %p77, %p78
      %p80 = scmp.ne.s32.totalorder %s68, %s69
      %p81 = scmp.eq.s32.totalorder %s24, 1
      %p82 = por %p80, %p81
      %p84 = scmp.ne.s32.totalorder %s69, %s83
      %p85 = scmp.eq.s32.totalorder %s24, 0
      %p86 = por %p84, %p85
      %s87 = ssub.s32 %s25, %s37
      %s88 = ssub.s32 %s26, %s33
      %s89 = sor.u32 %s87, %s88
      %p90 = scmp.eq.s32.totalorder %s89, 0
      %s92 = sadd.s32 %s91, 1
      %s93 = scalar_select %p90, %s91, %s92
      %p96 = pneg %p90
      %p97 = scmp.eq.s32.totalorder %s18, 1
      %p98 = por %p96, %p97
      %p99 = scmp.ne.s32.totalorder %s91, %s94
      %p100 = scmp.eq.s32.totalorder %s18, 0
      %p101 = por %p99, %p100
      %p102 = scmp.ne.s32.totalorder %s91, %s94
      %p103 = scmp.eq.s32.totalorder %s23, 1
      %p104 = por %p102, %p103
      %p105 = scmp.ne.s32.totalorder %s94, %s95
      %p106 = scmp.eq.s32.totalorder %s23, 0
      %p107 = por %p105, %p106
      %p108 = scmp.ne.s32.totalorder %s94, %s95
      %p109 = scmp.eq.s32.totalorder %s24, 1
      %p110 = por %p108, %p109
      %p112 = scmp.ne.s32.totalorder %s95, %s111
      %p113 = scmp.eq.s32.totalorder %s24, 0
      %p114 = por %p112, %p113
      %s116 = sadd.s32 %s115, 1
      %p119 = scmp.eq.s32.totalorder %s18, 1
      %p120 = scmp.ne.s32.totalorder %s115, %s117
      %p121 = scmp.eq.s32.totalorder %s18, 0
      %p122 = por %p120, %p121
      %p123 = scmp.ne.s32.totalorder %s115, %s117
      %p124 = scmp.eq.s32.totalorder %s23, 1
      %p125 = por %p123, %p124
      %p126 = scmp.ne.s32.totalorder %s117, %s118
      %p127 = scmp.eq.s32.totalorder %s23, 0
      %p128 = por %p126, %p127
      %p129 = scmp.ne.s32.totalorder %s117, %s118
      %p130 = scmp.eq.s32.totalorder %s24, 1
      %p131 = por %p129, %p130
      %p133 = scmp.ne.s32.totalorder %s118, %s132
      %p134 = scmp.eq.s32.totalorder %s24, 0
      %p135 = por %p133, %p134
      %s137 = sadd.s32 %s136, 1
      %p140 = scmp.eq.s32.totalorder %s18, 1
      %p141 = scmp.ne.s32.totalorder %s136, %s138
      %p142 = scmp.eq.s32.totalorder %s18, 0
      %p143 = por %p141, %p142
      %p144 = scmp.ne.s32.totalorder %s136, %s138
      %p145 = scmp.eq.s32.totalorder %s23, 1
      %p146 = por %p144, %p145
      %p147 = scmp.ne.s32.totalorder %s138, %s139
      %p148 = scmp.eq.s32.totalorder %s23, 0
      %p149 = por %p147, %p148
      %p150 = scmp.ne.s32.totalorder %s138, %s139
      %p151 = scmp.eq.s32.totalorder %s24, 1
      %p152 = por %p150, %p151
      %p154 = scmp.ne.s32.totalorder %s139, %s153
      %p155 = scmp.eq.s32.totalorder %s24, 0
      %p156 = por %p154, %p155
      %p157 = scmp.le.s32.totalorder 1, %s18
      %p158 = scmp.lt.s32.totalorder %s18, 3
      %p159 = pnand %p157, %p158
      %p160 = pneg %p159
      // Predicated region
      $region9: #{tpu_custom_call.1} parent=5 // pred_check
        _
      $region10: #{tpu_custom_call.1} parent=5 // pred_check_branch
        %162 = sbr.rel (%p159) target = $region12
      $region11: #{tpu_custom_call.1} parent=5 // pred_region
        %s163 = ssub.s32 %s18, 1
        // Predicated region
        $region13: #{tpu_custom_call.1} parent=11 // pred_check
          %p164 = pneg %p79
        $region14: #{tpu_custom_call.1} parent=11 // pred_check_branch
          %166 = sbr.rel (%p164) target = $region16
        $region15: #{tpu_custom_call.1} parent=11 // pred_region
          %s168 = ssub.s32 512, 512
          %169 = vsyncadd [#allocation6], %s168
          %s170 = sshll.u32 [#allocation5], 4
          %s171 = int_to_ptr.vmem [resolvable:$true] %s170
          %176 = dma.hbm_to_vmem [thread:$0]  %s1, 512, %s171, [#allocation6], 256, 256, 16
        $region16: #{tpu_custom_call.1} parent=11 // pred_fallthru
          _
      $region12: #{tpu_custom_call.1} parent=5 // pred_fallthru
        _
      %p177 = scmp.lt.s32.totalorder %s18, 2
      // Predicated region
      $region17: #{tpu_custom_call.1} parent=5 // pred_check
        %p178 = pneg %p177
      $region18: #{tpu_custom_call.1} parent=5 // pred_check_branch
        %180 = sbr.rel (%p178) target = $region20
      $region19: #{tpu_custom_call.1} parent=5 // pred_region
        // Predicated region
        $region21: #{tpu_custom_call.1} parent=19 // pred_check
          %p181 = pneg %p52
        $region22: #{tpu_custom_call.1} parent=19 // pred_check_branch
          %183 = sbr.rel (%p181) target = $region24
        $region23: #{tpu_custom_call.1} parent=19 // pred_region
          %s184 = sand.u32 %s42, 1
          %s185 = scalar_lea.sflag [#allocation3], %s184
          %s186 = sand.u32 %s42, 1
          %s187 = smul.addr %s186, 768
          %s188 = scalar_lea.vmem [#allocation2], %s187
          %s189 = smul.u32 4, %s26
          %s190 = ssub.s32 7, %s189
          %p191 = scmp.lt.s32.totalorder %s190, 4
          %s192 = scalar_select %p191, %s190, 4
          %s193 = smul.u32 3072, %s192
          %s195 = ssub.s32 12288, %s193
          %196 = vsyncadd %s185, %s195
          %p197 = scmp.ne.s32.totalorder 0, %s193
          %s198 = smul.addr %s25, 168
          %s199 = sadd.s32 %s189, %s198
          %s200 = smul.addr %s199, 128
          %s201 = scalar_lea.hbm %s0, %s200
          %s202 = smul.u32 %s192, 8
          %s203 = smul.u32 %s202, 24
          %s204 = sshll.u32 %s188, 4
          %s205 = int_to_ptr.vmem [resolvable:$true] %s204
          %s206 = sshll.u32 %s203, 4
          %210 = dma.hbm_to_vmem [thread:$0]  (%p197), %s201, %s206, %s205, %s185, 896, 512, %s202
        $region24: #{tpu_custom_call.1} parent=19 // pred_fallthru
          _
      $region20: #{tpu_custom_call.1} parent=5 // pred_fallthru
        _
      %p211 = scmp.le.s32.totalorder 1, %s18
      %p212 = scmp.lt.s32.totalorder %s18, 3
      %p213 = pnand %p211, %p212
      %p214 = pneg %p213
      // Predicated region
      $region25: #{tpu_custom_call.1} parent=5 // pred_check
        _
      $region26: #{tpu_custom_call.1} parent=5 // pred_check_branch
        %216 = sbr.rel (%p213) target = $region28
      $region27: #{tpu_custom_call.1} parent=5 // pred_region
        %s217 = ssub.s32 %s18, 1
        %s218 = sand.u32 %s45, 1
        %s219 = scalar_lea.sflag [#allocation3], %s218
        %s220 = sand.u32 %s45, 1
        %s221 = smul.addr %s220, 768
        %s222 = scalar_lea.vmem [#allocation2], %s221
        // Predicated region
        $region29: #{tpu_custom_call.1} parent=27 // pred_check
          %p223 = pneg %p58
        $region30: #{tpu_custom_call.1} parent=27 // pred_check_branch
          %225 = sbr.rel (%p223) target = $region32
        $region31: #{tpu_custom_call.1} parent=27 // pred_region
          %226 = dma.done %s219, 12288
        $region32: #{tpu_custom_call.1} parent=27 // pred_fallthru
          _
        // Predicated region
        $region33: #{tpu_custom_call.1} parent=27 // pred_check
          %p227 = pneg %p79
        $region34: #{tpu_custom_call.1} parent=27 // pred_check_branch
          %229 = sbr.rel (%p227) target = $region36
        $region35: #{tpu_custom_call.1} parent=27 // pred_region
          %230 = dma.done [#allocation6], 512
        $region36: #{tpu_custom_call.1} parent=27 // pred_fallthru
          _
        %s231 = sand.u32 %s45, 1
        %s232 = scalar_lea.sflag [#allocation3], %s231
        %s233 = sand.u32 %s45, 1
        %s234 = smul.addr %s233, 768
        %s235 = scalar_lea.vmem [#allocation2], %s234
        %p236 = pneg %p58
        %p237 = pneg %p55
        %p238 = pneg %p79
        %p239 = pneg %p76
        %p240 = pneg %p107
        %p241 = pneg %p104
        %s242 = sand.u32 %s94, 1
        %s243 = scalar_lea.sflag [#allocation4], %s242
        %s244 = sand.u32 %s94, 1
        %s245 = smul.addr %s244, 64
        %s246 = scalar_lea.vmem [#allocation7], %s245
        %p247 = pneg %p128
        %p248 = pneg %p125
        %p249 = pneg %p149
        %p250 = pneg %p146
        %s251 = smul.u32 4, %s28
        %s252 = ssub.s32 7, %s251
        %p253 = scmp.lt.s32.totalorder %s252, 4
        %s254 = scalar_select %p253, %s252, 4
        %s255 = smul.u32 3072, %s254
        %s256 = smul.u32 4, %s28
        %s257 = ssub.s32 7, %s256
        %p258 = scmp.lt.s32.totalorder %s257, 4
        %s259 = scalar_select %p258, %s257, 4
        %s260 = smul.u32 256, %s259
        %p261 = scmp.eq.s32.totalorder %s27, 0
        %p262 = scmp.eq.s32.totalorder %s28, 0
        %p263 = pnand %p261, %p262
        %p264 = pneg %p263
        // Predicated region
        $region37: #{tpu_custom_call.1} parent=27 // pred_check
          _
        $region38: #{tpu_custom_call.1} parent=27 // pred_check_branch
          %266 = sbr.rel (%p263) target = $region40
        $region39: #{tpu_custom_call.1} parent=27 // pred_region
          %vm267 = vcmask 7168
          %268 = vst.msk [vmem:[%s3] sm:$0xff] %vm267, 0.0
          %269 = vst.msk [vmem:[%s3 + $0x8] sm:$0xff] %vm267, 0.0
          %270 = vst.msk [vmem:[%s4] sm:$0xff] %vm267, 0.0
          %271 = vst.msk [vmem:[%s4 + $0x8] sm:$0xff] %vm267, 0.0
        $region40: #{tpu_custom_call.1} parent=27 // pred_fallthru
          _
        %v272 = vld [vmem:[%s222] sm:$0xff]
        %v273 = vld [vmem:[%s222 + $0x8] sm:$0xff]
        %v274 = vld [vmem:[%s222 + $0x10] sm:$0xff]
        %v275 = vld [vmem:[%s222 + $0x18] sm:$0xff]
        %v276 = vld [vmem:[%s222 + $0x20] sm:$0xff]
        %v277 = vld [vmem:[%s222 + $0x28] sm:$0xff]
        %v278 = vld [vmem:[%s222 + $0x30] sm:$0xff]
        %v279 = vld [vmem:[%s222 + $0x38] sm:$0xff]
        %v280 = vld [vmem:[%s222 + $0x40] sm:$0xff]
        %v281 = vld [vmem:[%s222 + $0x48] sm:$0xff]
        %v282 = vld [vmem:[%s222 + $0x50] sm:$0xff]
        %v283 = vld [vmem:[%s222 + $0x58] sm:$0xff]
        %v284 = vld [vmem:[%s222 + $0x60] sm:$0xff]
        %v285 = vld [vmem:[%s222 + $0x68] sm:$0xff]
        %v286 = vld [vmem:[%s222 + $0x70] sm:$0xff]
        %v287 = vld [vmem:[%s222 + $0x78] sm:$0xff]
        %v288 = vld [vmem:[%s222 + $0x80] sm:$0xff]
        %v289 = vld [vmem:[%s222 + $0x88] sm:$0xff]
        %v290 = vld [vmem:[%s222 + $0x90] sm:$0xff]
        %v291 = vld [vmem:[%s222 + $0x98] sm:$0xff]
        %v292 = vld [vmem:[%s222 + $0xa0] sm:$0xff]
        %v293 = vld [vmem:[%s222 + $0xa8] sm:$0xff]
        %v294 = vld [vmem:[%s222 + $0xb0] sm:$0xff]
        %v295 = vld [vmem:[%s222 + $0xb8] sm:$0xff]
        %v296 = vld [vmem:[%s222 + $0xc0] sm:$0xff]
        %v297 = vld [vmem:[%s222 + $0xc8] sm:$0xff]
        %v298 = vld [vmem:[%s222 + $0xd0] sm:$0xff]
        %v299 = vld [vmem:[%s222 + $0xd8] sm:$0xff]
        %v300 = vld [vmem:[%s222 + $0xe0] sm:$0xff]
        %v301 = vld [vmem:[%s222 + $0xe8] sm:$0xff]
        %v302 = vld [vmem:[%s222 + $0xf0] sm:$0xff]
        %v303 = vld [vmem:[%s222 + $0xf8] sm:$0xff]
        %v304 = vld [vmem:[%s222 + $0x100] sm:$0xff]
        %v305 = vld [vmem:[%s222 + $0x108] sm:$0xff]
        %v306 = vld [vmem:[%s222 + $0x110] sm:$0xff]
        %v307 = vld [vmem:[%s222 + $0x118] sm:$0xff]
        %v308 = vld [vmem:[%s222 + $0x120] sm:$0xff]
        %v309 = vld [vmem:[%s222 + $0x128] sm:$0xff]
        %v310 = vld [vmem:[%s222 + $0x130] sm:$0xff]
        %v311 = vld [vmem:[%s222 + $0x138] sm:$0xff]
        %v312 = vld [vmem:[%s222 + $0x140] sm:$0xff]
        %v313 = vld [vmem:[%s222 + $0x148] sm:$0xff]
        %v314 = vld [vmem:[%s222 + $0x150] sm:$0xff]
        %v315 = vld [vmem:[%s222 + $0x158] sm:$0xff]
        %v316 = vld [vmem:[%s222 + $0x160] sm:$0xff]
        %v317 = vld [vmem:[%s222 + $0x168] sm:$0xff]
        %v318 = vld [vmem:[%s222 + $0x170] sm:$0xff]
        %v319 = vld [vmem:[%s222 + $0x178] sm:$0xff]
        %v320 = vld [vmem:[%s222 + $0x180] sm:$0xff]
        %v321 = vld [vmem:[%s222 + $0x188] sm:$0xff]
        %v322 = vld [vmem:[%s222 + $0x190] sm:$0xff]
        %v323 = vld [vmem:[%s222 + $0x198] sm:$0xff]
        %v324 = vld [vmem:[%s222 + $0x1a0] sm:$0xff]
        %v325 = vld [vmem:[%s222 + $0x1a8] sm:$0xff]
        %v326 = vld [vmem:[%s222 + $0x1b0] sm:$0xff]
        %v327 = vld [vmem:[%s222 + $0x1b8] sm:$0xff]
        %v328 = vld [vmem:[%s222 + $0x1c0] sm:$0xff]
        %v329 = vld [vmem:[%s222 + $0x1c8] sm:$0xff]
        %v330 = vld [vmem:[%s222 + $0x1d0] sm:$0xff]
        %v331 = vld [vmem:[%s222 + $0x1d8] sm:$0xff]
        %v332 = vld [vmem:[%s222 + $0x1e0] sm:$0xff]
        %v333 = vld [vmem:[%s222 + $0x1e8] sm:$0xff]
        %v334 = vld [vmem:[%s222 + $0x1f0] sm:$0xff]
        %v335 = vld [vmem:[%s222 + $0x1f8] sm:$0xff]
        %v336 = vld [vmem:[%s222 + $0x200] sm:$0xff]
        %v337 = vld [vmem:[%s222 + $0x208] sm:$0xff]
        %v338 = vld [vmem:[%s222 + $0x210] sm:$0xff]
        %v339 = vld [vmem:[%s222 + $0x218] sm:$0xff]
        %v340 = vld [vmem:[%s222 + $0x220] sm:$0xff]
        %v341 = vld [vmem:[%s222 + $0x228] sm:$0xff]
        %v342 = vld [vmem:[%s222 + $0x230] sm:$0xff]
        %v343 = vld [vmem:[%s222 + $0x238] sm:$0xff]
        %v344 = vld [vmem:[%s222 + $0x240] sm:$0xff]
        %v345 = vld [vmem:[%s222 + $0x248] sm:$0xff]
        %v346 = vld [vmem:[%s222 + $0x250] sm:$0xff]
        %v347 = vld [vmem:[%s222 + $0x258] sm:$0xff]
        %v348 = vld [vmem:[%s222 + $0x260] sm:$0xff]
        %v349 = vld [vmem:[%s222 + $0x268] sm:$0xff]
        %v350 = vld [vmem:[%s222 + $0x270] sm:$0xff]
        %v351 = vld [vmem:[%s222 + $0x278] sm:$0xff]
        %v352 = vld [vmem:[%s222 + $0x280] sm:$0xff]
        %v353 = vld [vmem:[%s222 + $0x288] sm:$0xff]
        %v354 = vld [vmem:[%s222 + $0x290] sm:$0xff]
        %v355 = vld [vmem:[%s222 + $0x298] sm:$0xff]
        %v356 = vld [vmem:[%s222 + $0x2a0] sm:$0xff]
        %v357 = vld [vmem:[%s222 + $0x2a8] sm:$0xff]
        %v358 = vld [vmem:[%s222 + $0x2b0] sm:$0xff]
        %v359 = vld [vmem:[%s222 + $0x2b8] sm:$0xff]
        %v360 = vld [vmem:[%s222 + $0x2c0] sm:$0xff]
        %v361 = vld [vmem:[%s222 + $0x2c8] sm:$0xff]
        %v362 = vld [vmem:[%s222 + $0x2d0] sm:$0xff]
        %v363 = vld [vmem:[%s222 + $0x2d8] sm:$0xff]
        %v364 = vld [vmem:[%s222 + $0x2e0] sm:$0xff]
        %v365 = vld [vmem:[%s222 + $0x2e8] sm:$0xff]
        %v366 = vld [vmem:[%s222 + $0x2f0] sm:$0xff]
        %v367 = vld [vmem:[%s222 + $0x2f8] sm:$0xff]
        %v368 = vld [vmem:[#allocation5] sm:$0xff]
        %v369 = vld [vmem:[#allocation5 + $0x8] sm:$0xff]
        %v370 = vld [vmem:[#allocation5 + $0x10] sm:$0xff]
        %v371 = vld [vmem:[#allocation5 + $0x18] sm:$0xff]
        %vm372 = vcmask 523264
        %v374 = vsel %vm372, %v369, 0
        %v377 = vsel %vm372, %v371, 0
        %379 = vmatprep.subr.mxu0 %v333
        %380 = vmatpush1.msra.mxu0 %v332
        %381 = vmatprep.subr.mxu0 %v329
        %382 = vmatpush1.msra.mxu0 %v328
        %383 = vmatprep.subr.mxu0 %v325
        %384 = vmatpush1.msra.mxu0 %v324
        %385 = vmatprep.subr.mxu0 %v321
        %386 = vmatpush1.msra.mxu0 %v320
        %387 = vmatprep.subr.mxu0 %v317
        %388 = vmatpush1.msra.mxu0 %v316
        %389 = vmatprep.subr.mxu0 %v313
        %390 = vmatpush1.msra.mxu0 %v312
        %391 = vmatprep.subr.mxu0 %v309
        %392 = vmatpush1.msra.mxu0 %v308
        %393 = vmatprep.subr.mxu0 %v305
        %394 = vmatpush1.msra.mxu0 %v304
        %395 = vmatprep.subr.mxu0 %v301
        %396 = vmatpush1.msra.mxu0 %v300
        %397 = vmatprep.subr.mxu0 %v297
        %398 = vmatpush1.msra.mxu0 %v296
        %399 = vmatprep.subr.mxu0 %v293
        %400 = vmatpush1.msra.mxu0 %v292
        %401 = vmatprep.subr.mxu0 %v289
        %402 = vmatpush1.msra.mxu0 %v288
        %403 = vmatprep.subr.mxu0 %v285
        %404 = vmatpush1.msra.mxu0 %v284
        %405 = vmatprep.subr.mxu0 %v281
        %406 = vmatpush1.msra.mxu0 %v280
        %407 = vmatprep.subr.mxu0 %v277
        %408 = vmatpush1.msra.mxu0 %v276
        %409 = vmatprep.subr.mxu0 %v273
        %410 = vmatpush1.msra.mxu0 %v272
        %411 = vmatprep.subr.mxu0 0.0
        %412 = vmatpush2.msra.mxu0 0.0
        %413 = vmatprep.subr.mxu0 0.0
        %414 = vmatpush2.msra.mxu0 0.0
        %415 = vmatprep.subr.mxu0 0.0
        %416 = vmatpush2.msra.mxu0 0.0
        %417 = vmatprep.subr.mxu0 0.0
        %418 = vmatpush2.msra.mxu0 0.0
        %419 = vmatprep.subr.mxu0 0.0
        %420 = vmatpush2.msra.mxu0 0.0
        %421 = vmatprep.subr.mxu0 0.0
        %422 = vmatpush2.msra.mxu0 0.0
        %423 = vmatprep.subr.mxu0 0.0
        %424 = vmatpush2.msra.mxu0 0.0
        %425 = vmatprep.subr.mxu0 0.0
        %426 = vmatpush2.msra.mxu0 0.0
        %427 = vmatprep.subr.mxu0 %v365
        %428 = vmatpush2.msra.mxu0 %v364
        %429 = vmatprep.subr.mxu0 %v361
        %430 = vmatpush2.msra.mxu0 %v360
        %431 = vmatprep.subr.mxu0 %v357
        %432 = vmatpush2.msra.mxu0 %v356
        %433 = vmatprep.subr.mxu0 %v353
        %434 = vmatpush2.msra.mxu0 %v352
        %435 = vmatprep.subr.mxu0 %v349
        %436 = vmatpush2.msra.mxu0 %v348
        %437 = vmatprep.subr.mxu0 %v345
        %438 = vmatpush2.msra.mxu0 %v344
        %439 = vmatprep.subr.mxu0 %v341
        %440 = vmatpush2.msra.mxu0 %v340
        %441 = vmatprep.subr.mxu0 %v337
        %442 = vmatpush2.msra.mxu0 %v336
        %443 = vmatprep.mubr.f32.mxu0 %v374
        %444 = vmatmul.mubr.f32.gmra.mxu0 %v368
        %v445 = vpop.f32.mrf.mxu0
        %v446 = vadd.f32 0.0, %v445
        %v447 = vpop.f32.mrf.mxu0
        %v448 = vadd.f32 0.0, %v447
        %449 = vmatprep.mubr.f32.mxu0 %v377
        %450 = vmatmul.mubr.f32.gmra.mxu0 %v370
        %v451 = vpop.f32.mrf.mxu0
        %v452 = vadd.f32 0.0, %v451
        %v453 = vpop.f32.mrf.mxu0
        %v454 = vadd.f32 0.0, %v453
        %455 = vdwg.mxu0
        %456 = vmatprep.subr.mxu0 %v335
        %457 = vmatpush1.msra.mxu0 %v334
        %458 = vmatprep.subr.mxu0 %v331
        %459 = vmatpush1.msra.mxu0 %v330
        %460 = vmatprep.subr.mxu0 %v327
        %461 = vmatpush1.msra.mxu0 %v326
        %462 = vmatprep.subr.mxu0 %v323
        %463 = vmatpush1.msra.mxu0 %v322
        %464 = vmatprep.subr.mxu0 %v319
        %465 = vmatpush1.msra.mxu0 %v318
        %466 = vmatprep.subr.mxu0 %v315
        %467 = vmatpush1.msra.mxu0 %v314
        %468 = vmatprep.subr.mxu0 %v311
        %469 = vmatpush1.msra.mxu0 %v310
        %470 = vmatprep.subr.mxu0 %v307
        %471 = vmatpush1.msra.mxu0 %v306
        %472 = vmatprep.subr.mxu0 %v303
        %473 = vmatpush1.msra.mxu0 %v302
        %474 = vmatprep.subr.mxu0 %v299
        %475 = vmatpush1.msra.mxu0 %v298
        %476 = vmatprep.subr.mxu0 %v295
        %477 = vmatpush1.msra.mxu0 %v294
        %478 = vmatprep.subr.mxu0 %v291
        %479 = vmatpush1.msra.mxu0 %v290
        %480 = vmatprep.subr.mxu0 %v287
        %481 = vmatpush1.msra.mxu0 %v286
        %482 = vmatprep.subr.mxu0 %v283
        %483 = vmatpush1.msra.mxu0 %v282
        %484 = vmatprep.subr.mxu0 %v279
        %485 = vmatpush1.msra.mxu0 %v278
        %486 = vmatprep.subr.mxu0 %v275
        %487 = vmatpush1.msra.mxu0 %v274
        %488 = vmatprep.subr.mxu0 0.0
        %489 = vmatpush2.msra.mxu0 0.0
        %490 = vmatprep.subr.mxu0 0.0
        %491 = vmatpush2.msra.mxu0 0.0
        %492 = vmatprep.subr.mxu0 0.0
        %493 = vmatpush2.msra.mxu0 0.0
        %494 = vmatprep.subr.mxu0 0.0
        %495 = vmatpush2.msra.mxu0 0.0
        %496 = vmatprep.subr.mxu0 0.0
        %497 = vmatpush2.msra.mxu0 0.0
        %498 = vmatprep.subr.mxu0 0.0
        %499 = vmatpush2.msra.mxu0 0.0
        %500 = vmatprep.subr.mxu0 0.0
        %501 = vmatpush2.msra.mxu0 0.0
        %502 = vmatprep.subr.mxu0 0.0
        %503 = vmatpush2.msra.mxu0 0.0
        %504 = vmatprep.subr.mxu0 %v367
        %505 = vmatpush2.msra.mxu0 %v366
        %506 = vmatprep.subr.mxu0 %v363
        %507 = vmatpush2.msra.mxu0 %v362
        %508 = vmatprep.subr.mxu0 %v359
        %509 = vmatpush2.msra.mxu0 %v358
        %510 = vmatprep.subr.mxu0 %v355
        %511 = vmatpush2.msra.mxu0 %v354
        %512 = vmatprep.subr.mxu0 %v351
        %513 = vmatpush2.msra.mxu0 %v350
        %514 = vmatprep.subr.mxu0 %v347
        %515 = vmatpush2.msra.mxu0 %v346
        %516 = vmatprep.subr.mxu0 %v343
        %517 = vmatpush2.msra.mxu0 %v342
        %518 = vmatprep.subr.mxu0 %v339
        %519 = vmatpush2.msra.mxu0 %v338
        %520 = vmatprep.mubr.f32.mxu0 %v374
        %521 = vmatmul.mubr.f32.gmra.mxu0 %v368
        %v522 = vpop.f32.mrf.mxu0
        %v523 = vadd.f32 0.0, %v522
        %v524 = vpop.f32.mrf.mxu0
        %v525 = vadd.f32 0.0, %v524
        %526 = vmatprep.mubr.f32.mxu0 %v377
        %527 = vmatmul.mubr.f32.gmra.mxu0 %v370
        %v528 = vpop.f32.mrf.mxu0
        %v529 = vadd.f32 0.0, %v528
        %v530 = vpop.f32.mrf.mxu0
        %v531 = vadd.f32 0.0, %v530
        %532 = vdwg.mxu0
        %s533 = smul.u32 %s28, 512
        %v534 = vlaneseq
        %v535 = vand.u32 %v534, 127
        %v536 = vadd.s32 %v535, 128
        %v537 = vadd.s32 %v535, 256
        %v538 = vadd.s32 %v535, 384
        %v539 = vstv %s533
        %v540 = vadd.s32 %v539, %v535
        %v541 = vadd.s32 %v539, %v536
        %v542 = vadd.s32 %v539, %v537
        %v543 = vadd.s32 %v539, %v538
        %vm544 = vcmp.lt.s32.totalorder %v540, 784
        %vm545 = vcmp.lt.s32.totalorder %v541, 784
        %vm546 = vcmp.lt.s32.totalorder %v542, 784
        %vm547 = vcmp.lt.s32.totalorder %v543, 784
        %v548 = vsel %vm544, %v446, 0.0
        %v549 = vsel %vm545, %v448, 0.0
        %v550 = vsel %vm546, %v523, 0.0
        %v551 = vsel %vm547, %v525, 0.0
        %v552 = vsel %vm544, %v452, 0.0
        %v553 = vsel %vm545, %v454, 0.0
        %v554 = vsel %vm546, %v529, 0.0
        %v555 = vsel %vm547, %v531, 0.0
        %556 = vst [vmem:[%s246] sm:$0xff] %v548
        %557 = vst [vmem:[%s246 + $0x8] sm:$0xff] %v549
        %558 = vst [vmem:[%s246 + $0x10] sm:$0xff] %v550
        %559 = vst [vmem:[%s246 + $0x18] sm:$0xff] %v551
        %560 = vst [vmem:[%s246 + $0x20] sm:$0xff] %v552
        %561 = vst [vmem:[%s246 + $0x28] sm:$0xff] %v553
        %562 = vst [vmem:[%s246 + $0x30] sm:$0xff] %v554
        %563 = vst [vmem:[%s246 + $0x38] sm:$0xff] %v555
        %v564 = vld [vmem:[%s3] sm:$0xff]
        %v565 = vld [vmem:[%s3 + $0x8] sm:$0xff]
        %v566 = vadd.f32 %v548, %v549
        %v567 = vadd.f32 %v566, %v550
        %v568 = vadd.f32 %v567, %v551
        %569 = vadd.xlane.f32.xlu0 %v568
        %v570 = vpop.xlane.xlu0 %569
        %v571 = vadd.f32 %v552, %v553
        %v572 = vadd.f32 %v571, %v554
        %v573 = vadd.f32 %v572, %v555
        %574 = vadd.xlane.f32.xlu0 %v573
        %v575 = vpop.xlane.xlu0 %574
        %v576 = vadd.f32 %v564, %v570
        %v577 = vadd.f32 %v565, %v575
        %vm578 = vcmask 7168
        %579 = vst.msk [vmem:[%s3] sm:$0xff] %vm578, %v576
        %580 = vst.msk [vmem:[%s3 + $0x8] sm:$0xff] %vm578, %v577
        %v581 = vld [vmem:[%s4] sm:$0xff]
        %v582 = vld [vmem:[%s4 + $0x8] sm:$0xff]
        %v583 = vmul.f32 %v548, %v548
        %v584 = vmul.f32 %v549, %v549
        %v585 = vmul.f32 %v550, %v550
        %v586 = vmul.f32 %v551, %v551
        %v587 = vmul.f32 %v552, %v552
        %v588 = vmul.f32 %v553, %v553
        %v589 = vmul.f32 %v554, %v554
        %v590 = vmul.f32 %v555, %v555
        %v591 = vadd.f32 %v583, %v584
        %v592 = vadd.f32 %v591, %v585
        %v593 = vadd.f32 %v592, %v586
        %594 = vadd.xlane.f32.xlu0 %v593
        %v595 = vpop.xlane.xlu0 %594
        %v596 = vadd.f32 %v587, %v588
        %v597 = vadd.f32 %v596, %v589
        %v598 = vadd.f32 %v597, %v590
        %599 = vadd.xlane.f32.xlu0 %v598
        %v600 = vpop.xlane.xlu0 %599
        %v601 = vadd.f32 %v581, %v595
        %v602 = vadd.f32 %v582, %v600
        %603 = vst.msk [vmem:[%s4] sm:$0xff] %vm578, %v601
        %604 = vst.msk [vmem:[%s4 + $0x8] sm:$0xff] %vm578, %v602
        %s605 = sand.u32 %s94, 1
        %s606 = scalar_lea.sflag [#allocation4], %s605
        %s607 = sand.u32 %s94, 1
        %s608 = smul.addr %s607, 64
        %s609 = scalar_lea.vmem [#allocation7], %s608
        // Predicated region
        $region41: #{tpu_custom_call.1} parent=27 // pred_check
          %p610 = pneg %p104
        $region42: #{tpu_custom_call.1} parent=27 // pred_check_branch
          %612 = sbr.rel (%p610) target = $region44
        $region43: #{tpu_custom_call.1} parent=27 // pred_region
          %s613 = smul.u32 4, %s28
          %s614 = ssub.s32 7, %s613
          %p615 = scmp.lt.s32.totalorder %s614, 4
          %s616 = scalar_select %p615, %s614, 4
          %s617 = smul.u32 256, %s616
          %s619 = ssub.s32 1024, %s617
          %620 = vsyncadd %s606, %s619
          %p621 = scmp.ne.s32.totalorder 0, %s617
          %s622 = smul.addr %s27, 14
          %s623 = sadd.s32 %s613, %s622
          %s624 = smul.addr %s623, 128
          %s625 = scalar_lea.hbm %s2, %s624
          %s626 = smul.u32 %s616, 8
          %s627 = smul.u32 %s626, 2
          %s628 = sshll.u32 %s609, 4
          %s629 = int_to_ptr.vmem [resolvable:$true] %s628
          %s630 = sshll.u32 %s627, 4
          %634 = dma.vmem_to_hbm [thread:$0]  (%p621), %s629, %s630, %s625, %s606, 512, 896, %s626
        $region44: #{tpu_custom_call.1} parent=27 // pred_fallthru
          _
        // Predicated region
        $region45: #{tpu_custom_call.1} parent=27 // pred_check
          %p635 = pneg %p125
        $region46: #{tpu_custom_call.1} parent=27 // pred_check_branch
          %637 = sbr.rel (%p635) target = $region48
        $region47: #{tpu_custom_call.1} parent=27 // pred_region
          _
        $region48: #{tpu_custom_call.1} parent=27 // pred_fallthru
          _
        // Predicated region
        $region49: #{tpu_custom_call.1} parent=27 // pred_check
          %p638 = pneg %p146
        $region50: #{tpu_custom_call.1} parent=27 // pred_check_branch
          %640 = sbr.rel (%p638) target = $region52
        $region51: #{tpu_custom_call.1} parent=27 // pred_region
          _
        $region52: #{tpu_custom_call.1} parent=27 // pred_fallthru
          _
        // Predicated region
        $region53: #{tpu_custom_call.1} parent=27 // pred_check
          %p641 = pneg %p125
        $region54: #{tpu_custom_call.1} parent=27 // pred_check_branch
          %643 = sbr.rel (%p641) target = $region56
        $region55: #{tpu_custom_call.1} parent=27 // pred_region
          _
        $region56: #{tpu_custom_call.1} parent=27 // pred_fallthru
          _
        // Predicated region
        $region57: #{tpu_custom_call.1} parent=27 // pred_check
          %p644 = pneg %p146
        $region58: #{tpu_custom_call.1} parent=27 // pred_check_branch
          %646 = sbr.rel (%p644) target = $region60
        $region59: #{tpu_custom_call.1} parent=27 // pred_region
          _
        $region60: #{tpu_custom_call.1} parent=27 // pred_fallthru
          _
      $region28: #{tpu_custom_call.1} parent=5 // pred_fallthru
        _
      %p647 = scmp.le.s32.totalorder 2, %s18
      // Predicated region
      $region61: #{tpu_custom_call.1} parent=5 // pred_check
        %p648 = pneg %p647
      $region62: #{tpu_custom_call.1} parent=5 // pred_check_branch
        %650 = sbr.rel (%p648) target = $region64
      $region63: #{tpu_custom_call.1} parent=5 // pred_region
        %s651 = ssub.s32 %s18, 2
        // Predicated region
        $region65: #{tpu_custom_call.1} parent=63 // pred_check
          %p652 = pneg %p110
        $region66: #{tpu_custom_call.1} parent=63 // pred_check_branch
          %654 = sbr.rel (%p652) target = $region68
        $region67: #{tpu_custom_call.1} parent=63 // pred_region
          %s655 = sand.u32 %s95, 1
          %s656 = scalar_lea.sflag [#allocation4], %s655
          %s657 = sand.u32 %s95, 1
          %s658 = smul.addr %s657, 64
          %s659 = scalar_lea.vmem [#allocation7], %s658
          %660 = dma.done %s656, 1024
        $region68: #{tpu_custom_call.1} parent=63 // pred_fallthru
          _
      $region64: #{tpu_custom_call.1} parent=5 // pred_fallthru
        _
    $region6: #{tpu_custom_call.1} parent=1 // loop_footer
      %s22 = sadd.s32 1, %s18
    $region7: #{tpu_custom_call.1} parent=1 // loop_footer_branch
      %17 = sbr.rel target = $region3
    $region8: #{tpu_custom_call.1} parent=1 // loop_exit
      _
    %661 = vsyncpa [#allocation3], 1
    %s662 = scalar_lea.sflag [#allocation3], 1
    %663 = vsyncpa %s662, 1
    %664 = vsyncpa [#allocation6], 1
    %665 = vsyncpa [#allocation4], 1
    %s666 = scalar_lea.sflag [#allocation4], 1
    %667 = vsyncpa %s666, 1

</llo_original>
